<compile_context>
chip_gen: v5e
topology: v5e:2x2
jax: 0.10.0
libtpu: 0.0.40
codegen_flags: <defaults>
</compile_context>

<pallas_src>
import jax
import jax.numpy as jnp
from jax.experimental import pallas as pl
from jax.experimental.pallas import tpu as pltpu


_NEG_BIG = -1e30  # finite "minus infinity" for padded class columns (no inf*0 NaNs)


def _round_up(x, m):
    return ((x + m - 1) // m) * m


def _pick_tile_t(T, S, H, vmem_budget_bytes=8 << 20):
    """Pick the text tile so the double-buffered (tT, S, H) f32 activation tile
    stays well under a conservative VMEM budget (v7x has 64 MiB vs 128 MiB on
    v5e/v6e, so leave headroom for weights / output / compiler scratch)."""
    per_row = 2 * S * H * 4  # two pipeline buffers, f32
    tT = max(1, vmem_budget_bytes // per_row)
    if tT >= T:
        return T                      # single tile == full (padded) extent
    return max(8, (tT // 8) * 8)      # sublane-aligned tile


# ---------------------------------------------------------------------------
# Kernel 1: text tower (tiled over T, "parallel" axis)
#   synthetic LLM body: masked mean pool over sequence + tanh (stand-in for
#   last_hidden_state[:, 0, :]), then the linear embedding head:
#   (tT, H) @ (H, Ep) + b -> (tT, Ep)   (bf16 MXU operands, f32 accumulate)
# ---------------------------------------------------------------------------
def _text_tower_kernel(tok_ref, mask_ref, w_ref, b_ref, out_ref):
    tok = tok_ref[...]                                   # (tT, S, H) f32
    mask = mask_ref[...]                                 # (tT, S)    f32
    masked = tok * mask[:, :, None]
    denom = jnp.maximum(jnp.sum(mask, axis=1, keepdims=True), 1.0)   # guard all-zero mask
    pooled = jnp.sum(masked, axis=1) / denom                          # (tT, H)
    cls_hidden = jnp.tanh(pooled)                                     # synthetic CLS state
    out_ref[...] = (
        jnp.dot(cls_hidden.astype(jnp.bfloat16), w_ref[...],
                preferred_element_type=jnp.float32)
        + b_ref[...]
    )


def text_tower(tok_emb, mask, w_head_bf16, b_head, tT):
    T_pad, S, H = tok_emb.shape
    Ep = w_head_bf16.shape[1]
    nT = T_pad // tT
    return pl.pallas_call(
        _text_tower_kernel,
        out_shape=jax.ShapeDtypeStruct((T_pad, Ep), jnp.float32),
        grid=(nT,),
        in_specs=[
            pl.BlockSpec((tT, S, H), lambda i: (i, 0, 0)),
            pl.BlockSpec((tT, S), lambda i: (i, 0)),
            pl.BlockSpec((H, Ep), lambda i: (0, 0)),
            pl.BlockSpec((1, Ep), lambda i: (0, 0)),
        ],
        out_specs=pl.BlockSpec((tT, Ep), lambda i: (i, 0)),
        compiler_params=pltpu.CompilerParams(dimension_semantics=("parallel",)),
    )(tok_emb, mask, w_head_bf16, b_head)


# ---------------------------------------------------------------------------
# Kernel 2: fused combiner + mean cross-entropy (ignore_index = -100)
#   logits[t, u, c] = (text_emb @ Wt)[t, c] + (user_emb @ Wu)[u, c] + b[c]
#   The (tT, U, Cp) logits tile is written out (lane-dense, Cp multiple of 128)
#   and consumed immediately for the loss; (sum_loss, sum_valid) accumulate in
#   SMEM scratch across the T grid axis ("arbitrary" semantics).
#   Padded class columns carry a -1e30 bias so they drop out of the softmax.
# ---------------------------------------------------------------------------
def _combiner_ce_kernel(text_ref, user_ref, wt_ref, wu_ref, b_ref, labels_ref,
                        logits_ref, loss_ref, acc_ref):
    i = pl.program_id(0)

    @pl.when(i == 0)
    def _():
        acc_ref[0] = 0.0
        acc_ref[1] = 0.0

    t_log = jnp.dot(text_ref[...].astype(jnp.bfloat16), wt_ref[...],
                    preferred_element_type=jnp.float32)               # (tT, Cp)
    u_log = jnp.dot(user_ref[...].astype(jnp.bfloat16), wu_ref[...],
                    preferred_element_type=jnp.float32)               # (U, Cp)
    logits = t_log[:, None, :] + u_log[None, :, :] + b_ref[...][None, :, :]  # (tT, U, Cp)
    logits_ref[...] = logits

    labels = labels_ref[...]                                           # (tT, U) int32
    m = jnp.max(logits, axis=-1, keepdims=True)                        # (tT, U, 1)
    lse = m + jnp.log(jnp.sum(jnp.exp(logits - m), axis=-1, keepdims=True))
    class_ids = jax.lax.broadcasted_iota(jnp.int32, logits.shape, 2)
    onehot = (class_ids == labels[:, :, None]).astype(jnp.float32)
    true_logit = jnp.sum(logits * onehot, axis=-1, keepdims=True)
    per_row = (lse - true_logit)[..., 0]                               # (tT, U)
    valid = (labels != -100).astype(jnp.float32)

    acc_ref[0] += jnp.sum(per_row * valid)
    acc_ref[1] += jnp.sum(valid)
    # running mean: holds the final value after the last grid step
    loss_ref[0, 0] = acc_ref[0] / jnp.maximum(acc_ref[1], 1.0)


def combiner_ce(text_emb, user_emb, w_text_bf16, w_user_bf16, b_comb, labels, tT):
    T_pad, Ep = text_emb.shape
    U = user_emb.shape[0]
    Cp = w_text_bf16.shape[1]
    nT = T_pad // tT
    logits, loss = pl.pallas_call(
        _combiner_ce_kernel,
        out_shape=(
            jax.ShapeDtypeStruct((T_pad, U, Cp), jnp.float32),
            jax.ShapeDtypeStruct((1, 1), jnp.float32),
        ),
        grid=(nT,),
        in_specs=[
            pl.BlockSpec((tT, Ep), lambda i: (i, 0)),
            pl.BlockSpec((U, Ep), lambda i: (0, 0)),
            pl.BlockSpec((Ep, Cp), lambda i: (0, 0)),
            pl.BlockSpec((Ep, Cp), lambda i: (0, 0)),
            pl.BlockSpec((1, Cp), lambda i: (0, 0)),
            pl.BlockSpec((tT, U), lambda i: (i, 0)),
        ],
        out_specs=(
            pl.BlockSpec((tT, U, Cp), lambda i: (i, 0, 0)),
            pl.BlockSpec(memory_space=pltpu.MemorySpace.SMEM),
        ),
        scratch_shapes=[pltpu.SMEM((2,), jnp.float32)],
        # T axis is a reduction for the loss accumulator -> "arbitrary"
        compiler_params=pltpu.CompilerParams(dimension_semantics=("arbitrary",)),
    )(text_emb, user_emb, w_text_bf16, w_user_bf16, b_comb, labels)
    return logits, loss


# ---------------------------------------------------------------------------
# Recommender forward (simple / 'shared' path)
# ---------------------------------------------------------------------------
def recommender_forward(params, input_ids, attention_mask, labels, annotator_indecies):
    H, E = params["w_head"].shape
    C = params["w_text"].shape[1]
    T, S = input_ids.shape
    U = annotator_indecies.shape[0]

    Ep = _round_up(E, 128)   # lane-dense embedding dim
    Cp = _round_up(C, 128)   # lane-dense class dim

    tT = _pick_tile_t(T, S, H)
    T_pad = pl.cdiv(T, tT) * tT
    pad_t = T_pad - T

    # Pad texts so the grid divides evenly; padded rows get an all-zero
    # attention mask and label -100 so they are ignored in the loss.
    input_ids_p = jnp.pad(input_ids, ((0, pad_t), (0, 0)))
    mask_p = jnp.pad(attention_mask.astype(jnp.float32), ((0, pad_t), (0, 0)))
    labels_p = jnp.pad(labels.astype(jnp.int32), ((0, pad_t), (0, 0)), constant_values=-100)

    # Lane-pad parameters (zero rows/cols are numerically inert; the combiner
    # bias pad is -1e30 so padded classes vanish from the softmax) and ship
    # matmul weights as bf16.
    w_head = jnp.pad(params["w_head"], ((0, 0), (0, Ep - E))).astype(jnp.bfloat16)      # (H, Ep)
    b_head = jnp.pad(params["b_head"], ((0, 0), (0, Ep - E)))                            # (1, Ep)
    w_text = jnp.pad(params["w_text"], ((0, Ep - E), (0, Cp - C))).astype(jnp.bfloat16)  # (Ep, Cp)
    w_user = jnp.pad(params["w_user"], ((0, Ep - E), (0, Cp - C))).astype(jnp.bfloat16)  # (Ep, Cp)
    b_comb = jnp.pad(params["b_comb"], ((0, 0), (0, Cp - C)), constant_values=_NEG_BIG)  # (1, Cp)

    # user tower: embedding lookup (glue)
    user_embeddings = jnp.take(params["user_table"], annotator_indecies, axis=0)         # (U, E)
    user_embeddings_p = jnp.pad(user_embeddings, ((0, 0), (0, Ep - E)))                   # (U, Ep)

    # token embedding lookup (glue); synthetic transformer body + head in Pallas
    tok_emb = jnp.take(params["vocab_table"], input_ids_p, axis=0)                        # (T_pad, S, H)

    text_embeddings_p = text_tower(tok_emb, mask_p, w_head, b_head, tT)                   # (T_pad, Ep)

    logits_p, loss = combiner_ce(text_embeddings_p, user_embeddings_p,
                                 w_text, w_user, b_comb, labels_p, tT)                    # (T_pad,U,Cp), (1,1)

    logits = logits_p[:T, :, :C]
    text_embeddings = text_embeddings_p[:T, :E]
    # mirrors SequenceClassifierOutput(loss, logits, hidden_states=(text_embeddings,))
    return loss[0, 0], logits, (text_embeddings,)


if __name__ == "__main__":
    # small shapes consistent with the module's forward
    T, S, H, E, U, C, VOCAB = 4, 16, 64, 32, 3, 5, 97

    key = jax.random.PRNGKey(0)
    keys = jax.random.split(key, 10)

    params = {
        "vocab_table": 0.1 * jax.random.normal(keys[0], (VOCAB, H), jnp.float32),
        "user_table": 0.1 * jax.random.normal(keys[1], (U, E), jnp.float32),
        "w_head": 0.1 * jax.random.normal(keys[2], (H, E), jnp.float32),
        "b_head": 0.1 * jax.random.normal(keys[3], (1, E), jnp.float32),
        "w_text": 0.1 * jax.random.normal(keys[4], (E, C), jnp.float32),
        "w_user": 0.1 * jax.random.normal(keys[5], (E, C), jnp.float32),
        "b_comb": 0.1 * jax.random.normal(keys[6], (1, C), jnp.float32),
    }

    input_ids = jax.random.randint(keys[7], (T, S), 0, VOCAB, dtype=jnp.int32)
    lengths = jax.random.randint(keys[8], (T, 1), 4, S + 1, dtype=jnp.int32)
    attention_mask = (jnp.arange(S, dtype=jnp.int32)[None, :] < lengths).astype(jnp.int32)
    labels = jax.random.randint(keys[9], (T, U), 0, C, dtype=jnp.int32)
    annotator_indecies = jnp.arange(U, dtype=jnp.int32)

    loss, logits, hidden_states = recommender_forward(
        params, input_ids, attention_mask, labels, annotator_indecies
    )
    jax.block_until_ready(loss)
    jax.block_until_ready(logits)
    jax.block_until_ready(hidden_states[0])
    print("KERNEL_OK")
</pallas_src>

<mosaic_0001>
module attributes {stable_mosaic.version = 11 : i64} {
  func.func @_text_tower_kernel(%arg0: i32, %arg1: memref<4x16x64xf32, #tpu.memory_space<vmem>>, %arg2: memref<4x16xf32, #tpu.memory_space<vmem>>, %arg3: memref<64x128xbf16, #tpu.memory_space<vmem>>, %arg4: memref<1x128xf32, #tpu.memory_space<vmem>>, %arg5: memref<4x128xf32, #tpu.memory_space<vmem>>) attributes {dimension_semantics = [#tpu.dimension_semantics<parallel>], iteration_bounds = array<i64: 1>, scalar_prefetch = 0 : i64, scratch_operands = 0 : i64, tpu.core_type = #tpu.core_type<tc>, window_params = [{transform_indices = @transform_0, window_bounds = array<i64: 4, 16, 64>}, {transform_indices = @transform_1, window_bounds = array<i64: 4, 16>}, {pipeline_mode = #tpu.pipeline_mode<synchronous>, transform_indices = @transform_2, window_bounds = array<i64: 64, 128>}, {pipeline_mode = #tpu.pipeline_mode<synchronous>, transform_indices = @transform_3, window_bounds = array<i64: 1, 128>}, {transform_indices = @transform_4, window_bounds = array<i64: 4, 128>}]} {
    %c0 = arith.constant 0 : index
    %c0_0 = arith.constant 0 : index
    %c0_1 = arith.constant 0 : index
    %0 = vector.load %arg1[%c0, %c0_0, %c0_1] : memref<4x16x64xf32, #tpu.memory_space<vmem>>, vector<4x16x64xf32>
    %c0_2 = arith.constant 0 : index
    %c0_3 = arith.constant 0 : index
    %1 = vector.load %arg2[%c0_2, %c0_3] : memref<4x16xf32, #tpu.memory_space<vmem>>, vector<4x16xf32>
    %2 = vector.shape_cast %1 : vector<4x16xf32> to vector<4x16x1xf32>
    %3 = vector.broadcast %2 : vector<4x16x1xf32> to vector<4x16x64xf32>
    %4 = arith.mulf %0, %3 : vector<4x16x64xf32>
    %cst = arith.constant dense<0.000000e+00> : vector<4xf32>
    %5 = vector.multi_reduction <add>, %1, %cst [1] : vector<4x16xf32> to vector<4xf32>
    %6 = vector.shape_cast %5 : vector<4xf32> to vector<4x1xf32>
    %cst_4 = arith.constant 1.000000e+00 : f32
    %7 = vector.broadcast %cst_4 : f32 to vector<4x1xf32>
    %8 = arith.maximumf %6, %7 : vector<4x1xf32>
    %cst_5 = arith.constant dense<0.000000e+00> : vector<4x64xf32>
    %9 = vector.multi_reduction <add>, %4, %cst_5 [1] : vector<4x16x64xf32> to vector<4x64xf32>
    %10 = vector.broadcast %8 : vector<4x1xf32> to vector<4x64xf32>
    %11 = arith.divf %9, %10 : vector<4x64xf32>
    %12 = math.tanh %11 : vector<4x64xf32>
    %13 = arith.truncf %12 : vector<4x64xf32> to vector<4x64xbf16>
    %c0_6 = arith.constant 0 : index
    %c0_7 = arith.constant 0 : index
    %14 = vector.load %arg3[%c0_6, %c0_7] : memref<64x128xbf16, #tpu.memory_space<vmem>>, vector<64x128xbf16>
    %cst_8 = arith.constant dense<0.000000e+00> : vector<4x128xf32>
    %15 = tpu.matmul %13, %14, %cst_8 {dimension_numbers = #tpu.dot_dimension_numbers<[1], [0], [0], [1], [0, 0, 1, 1], [], []>} : vector<4x64xbf16>, vector<64x128xbf16>, vector<4x128xf32> -> vector<4x128xf32>
    %c0_9 = arith.constant 0 : index
    %c0_10 = arith.constant 0 : index
    %16 = vector.load %arg4[%c0_9, %c0_10] : memref<1x128xf32, #tpu.memory_space<vmem>>, vector<1x128xf32>
    %17 = vector.broadcast %16 : vector<1x128xf32> to vector<4x128xf32>
    %18 = arith.addf %15, %17 : vector<4x128xf32>
    %c0_11 = arith.constant 0 : index
    %c0_12 = arith.constant 0 : index
    %19 = vector.load %arg5[%c0_11, %c0_12] : memref<4x128xf32, #tpu.memory_space<vmem>>, vector<4x128xf32>
    tpu.vector_store %arg5[%c0_11, %c0_12], %18 {strides = array<i32>} : memref<4x128xf32, #tpu.memory_space<vmem>>, vector<4x128xf32>,
    return
  }
  func.func @transform_0(%arg0: i32) -> (i32, i32, i32) {
    %c0_i32 = arith.constant 0 : i32
    %c0_i32_0 = arith.constant 0 : i32
    %c0_i32_1 = arith.constant 0 : i32
    return %arg0, %c0_i32, %c0_i32_0 : i32, i32, i32
  }
  func.func @transform_1(%arg0: i32) -> (i32, i32) {
    %c0_i32 = arith.constant 0 : i32
    %c0_i32_0 = arith.constant 0 : i32
    return %arg0, %c0_i32 : i32, i32
  }
  func.func @transform_2(%arg0: i32) -> (i32, i32) {
    %c0_i32 = arith.constant 0 : i32
    %c0_i32_0 = arith.constant 0 : i32
    %c0_i32_1 = arith.constant 0 : i32
    return %c0_i32, %c0_i32_0 : i32, i32
  }
  func.func @transform_3(%arg0: i32) -> (i32, i32) {
    %c0_i32 = arith.constant 0 : i32
    %c0_i32_0 = arith.constant 0 : i32
    %c0_i32_1 = arith.constant 0 : i32
    return %c0_i32, %c0_i32_0 : i32, i32
  }
  func.func @transform_4(%arg0: i32) -> (i32, i32) {
    %c0_i32 = arith.constant 0 : i32
    %c0_i32_0 = arith.constant 0 : i32
    return %arg0, %c0_i32 : i32, i32
  }
}

</mosaic_0001>

<llo_original>
// kernel: tpu_custom_call.1
$region0: #{tpu_custom_call.1}
  #allocation0 [shape = 'u32[]', space=smem, size = 0x4, offset = 0x4, fixed_abs, tag = 'smem constant byte address 0x4 - core index']
  #allocation1 [shape = 'u32[72,128]{1,0:T(1,128)}', space=vmem, size = 0x9000, scoped, tag = 'internal scratch']
  %s0 = inlined_call_operand.hbm [shape: f32[4,16,64], index: 0, kind: input, shape index: {}]
  %s1 = inlined_call_operand.hbm [shape: f32[4,16], index: 1, kind: input, shape index: {}]
  %s2 = inlined_call_operand.hbm [shape: bf16[64,128], index: 2, kind: input, shape index: {}]
  %s3 = inlined_call_operand.vmem [shape: f32[1,128], index: 3, kind: input, shape index: {}]
  %s4 = inlined_call_operand.hbm [shape: f32[4,128], index: 4, kind: output, shape index: {}]
  %s5 = sld [smem:[#allocation0]]
  $region38: #{tpu_custom_call.1} parent=0
    _
  %s7 = ssub.s32 1, %s5
  %s8 = scalar_select 0, %s7, %s5
  $region1: #{tpu_custom_call.1} parent=0
    #allocation2 [shape = 'u8[32768]{0}', space=vmem, size = 0x8000, scoped, tag = 'input window, operand 0, single buffered']
    #allocation3 [shape = 's32[1]{0}', space=sflag, size = 0x4, scoped, tag = 'scoped memory for tpu_custom_call.1']
    #allocation4 [shape = 's32[1]{0}', space=sflag, size = 0x4, scoped, tag = 'scoped memory for tpu_custom_call.1']
    #allocation5 [shape = 'u8[2048]{0}', space=vmem, size = 0x800, scoped, tag = 'input window, operand 1, single buffered']
    #allocation6 [shape = 's32[1]{0}', space=sflag, size = 0x4, scoped, tag = 'scoped memory for tpu_custom_call.1']
    #allocation7 [shape = 'u8[16384]{0}', space=vmem, size = 0x4000, scoped, tag = 'input window, operand 2, single buffered']
    #allocation8 [shape = 'u8[2048]{0}', space=vmem, size = 0x800, scoped, tag = 'output window, operand 0, single buffered']
    %9 = vsyncpa [#allocation3], 0
    %10 = vsyncpa [#allocation6], 0
    %11 = vsyncpa [#allocation4], 0
    // Predicated region
    $region2: #{tpu_custom_call.1} parent=1 // pred_check
      _
    $region3: #{tpu_custom_call.1} parent=1 // pred_check_branch
      %13 = sbr.rel (0) target = $region5
    $region4: #{tpu_custom_call.1} parent=1 // pred_region
      %15 = vsyncadd [#allocation3], 0
      %s16 = sshll.u32 %s0, 4
      %s17 = int_to_ptr.hbm [resolvable:$true] %s16
      %s18 = sshll.u32 [#allocation2], 4
      %s19 = int_to_ptr.vmem [resolvable:$true] %s18
      %24 = dma.hbm_to_vmem [thread:$0]  %s17, 1024, %s19, [#allocation3], 128, 128, 8
    $region5: #{tpu_custom_call.1} parent=1 // pred_fallthru
      _
    // Predicated region
    $region6: #{tpu_custom_call.1} parent=1 // pred_check
      _
    $region7: #{tpu_custom_call.1} parent=1 // pred_check_branch
      %26 = sbr.rel (0) target = $region9
    $region8: #{tpu_custom_call.1} parent=1 // pred_region
      %28 = vsyncadd [#allocation6], 0
      %s30 = sshll.u32 %s1, 4
      %s31 = int_to_ptr.hbm [resolvable:$true] %s30
      %s32 = sshll.u32 [#allocation5], 4
      %s33 = int_to_ptr.vmem [resolvable:$true] %s32
      %35 = dma.hbm_to_vmem [thread:$0]  %s31, 64, %s33, [#allocation6]
    $region9: #{tpu_custom_call.1} parent=1 // pred_fallthru
      _
    // Predicated region
    $region10: #{tpu_custom_call.1} parent=1 // pred_check
      _
    $region11: #{tpu_custom_call.1} parent=1 // pred_check_branch
      %37 = sbr.rel (0) target = $region13
    $region12: #{tpu_custom_call.1} parent=1 // pred_region
      %39 = vsyncadd [#allocation6], 0
      %s40 = sshll.u32 %s2, 4
      %s41 = int_to_ptr.hbm [resolvable:$true] %s40
      %s42 = sshll.u32 [#allocation7], 4
      %s43 = int_to_ptr.vmem [resolvable:$true] %s42
      %48 = dma.hbm_to_vmem [thread:$0]  %s41, 512, %s43, [#allocation6], 64, 64, 4
    $region13: #{tpu_custom_call.1} parent=1 // pred_fallthru
      _
    // Predicated region
    $region14: #{tpu_custom_call.1} parent=1 // pred_check
      _
    $region15: #{tpu_custom_call.1} parent=1 // pred_check_branch
      %50 = sbr.rel (0) target = $region17
    $region16: #{tpu_custom_call.1} parent=1 // pred_region
      _
    $region17: #{tpu_custom_call.1} parent=1 // pred_fallthru
      _
    // Predicated region
    $region18: #{tpu_custom_call.1} parent=1 // pred_check
      _
    $region19: #{tpu_custom_call.1} parent=1 // pred_check_branch
      %52 = sbr.rel (0) target = $region21
    $region20: #{tpu_custom_call.1} parent=1 // pred_region
      %54 = dma.done [#allocation3], 1024
    $region21: #{tpu_custom_call.1} parent=1 // pred_fallthru
      _
    // Predicated region
    $region22: #{tpu_custom_call.1} parent=1 // pred_check
      _
    $region23: #{tpu_custom_call.1} parent=1 // pred_check_branch
      %56 = sbr.rel (0) target = $region25
    $region24: #{tpu_custom_call.1} parent=1 // pred_region
      %58 = dma.done [#allocation6], 64
    $region25: #{tpu_custom_call.1} parent=1 // pred_fallthru
      _
    // Predicated region
    $region26: #{tpu_custom_call.1} parent=1 // pred_check
      _
    $region27: #{tpu_custom_call.1} parent=1 // pred_check_branch
      %60 = sbr.rel (0) target = $region29
    $region28: #{tpu_custom_call.1} parent=1 // pred_region
      %62 = dma.done [#allocation6], 512
    $region29: #{tpu_custom_call.1} parent=1 // pred_fallthru
      _
    %v64 = vld [vmem:[#allocation2] sm:$0xff]
    %v65 = vld [vmem:[#allocation2 + $0x8] sm:$0xff]
    %v66 = vld [vmem:[#allocation2 + $0x10] sm:$0xff]
    %v67 = vld [vmem:[#allocation2 + $0x18] sm:$0xff]
    %v68 = vld [vmem:[#allocation2 + $0x20] sm:$0xff]
    %v69 = vld [vmem:[#allocation2 + $0x28] sm:$0xff]
    %v70 = vld [vmem:[#allocation2 + $0x30] sm:$0xff]
    %v71 = vld [vmem:[#allocation2 + $0x38] sm:$0xff]
    %v72 = vld [vmem:[#allocation5] sm:$0xf]
    %v73 = vperm.slane %v72, 0
    %v74 = vlaneseq
    %v75 = vshrl.u32 %v74, 7
    %77 = vset.pattern.permute.xlu0 %v75
    %78 = vperm.xlu0 %77, %v73
    %v79 = vpop.permute.xlu0 %78
    %v80 = vlaneseq
    %v81 = vshrl.u32 %v80, 7
    %v82 = vadd.s32 %v81, 8
    %83 = vset.pattern.permute.xlu0 %v82
    %84 = vperm.xlu0 %83, %v73
    %v85 = vpop.permute.xlu0 %84
    %v86 = vperm.slane %v72, 1
    %v87 = vlaneseq
    %v88 = vshrl.u32 %v87, 7
    %90 = vset.pattern.permute.xlu0 %v88
    %91 = vperm.xlu0 %90, %v86
    %v92 = vpop.permute.xlu0 %91
    %v93 = vlaneseq
    %v94 = vshrl.u32 %v93, 7
    %v95 = vadd.s32 %v94, 8
    %96 = vset.pattern.permute.xlu0 %v95
    %97 = vperm.xlu0 %96, %v86
    %v98 = vpop.permute.xlu0 %97
    %v99 = vperm.slane %v72, 2
    %v100 = vlaneseq
    %v101 = vshrl.u32 %v100, 7
    %103 = vset.pattern.permute.xlu0 %v101
    %104 = vperm.xlu0 %103, %v99
    %v105 = vpop.permute.xlu0 %104
    %v106 = vlaneseq
    %v107 = vshrl.u32 %v106, 7
    %v108 = vadd.s32 %v107, 8
    %109 = vset.pattern.permute.xlu0 %v108
    %110 = vperm.xlu0 %109, %v99
    %v111 = vpop.permute.xlu0 %110
    %v112 = vperm.slane %v72, 3
    %v113 = vlaneseq
    %v114 = vshrl.u32 %v113, 7
    %116 = vset.pattern.permute.xlu0 %v114
    %117 = vperm.xlu0 %116, %v112
    %v118 = vpop.permute.xlu0 %117
    %v119 = vlaneseq
    %v120 = vshrl.u32 %v119, 7
    %v121 = vadd.s32 %v120, 8
    %122 = vset.pattern.permute.xlu0 %v121
    %123 = vperm.xlu0 %122, %v112
    %v124 = vpop.permute.xlu0 %123
    %v125 = vmul.f32 %v64, %v79
    %v126 = vmul.f32 %v65, %v85
    %v127 = vmul.f32 %v66, %v92
    %v128 = vmul.f32 %v67, %v98
    %v129 = vmul.f32 %v68, %v105
    %v130 = vmul.f32 %v69, %v111
    %v131 = vmul.f32 %v70, %v118
    %v132 = vmul.f32 %v71, %v124
    %vm133 = vcmask 125952
    %v134 = vsel %vm133, %v72, 0.0
    %135 = vadd.xlane.f32.xlu0 %v134
    %v136 = vpop.xlane.xlu0 %135
    %v137 = vmax.f32 %v136, 1.0
    %vm138 = vcmask 523264
    %v139 = vsel %vm138, %v125, 0.0
    %v140 = vsel %vm138, %v126, 0.0
    %v141 = vadd.f32 %v139, %v140
    %v142 = vrot.slane %v141, 4
    %v143 = vadd.f32 %v141, %v142
    %v144 = vrot.slane %v143, 2
    %v145 = vadd.f32 %v143, %v144
    %v146 = vrot.slane %v145, 1
    %v147 = vadd.f32 %v145, %v146
    %v148 = vsel %vm138, %v127, 0.0
    %v149 = vsel %vm138, %v128, 0.0
    %v150 = vadd.f32 %v148, %v149
    %v151 = vrot.slane %v150, 4
    %v152 = vadd.f32 %v150, %v151
    %v153 = vrot.slane %v152, 2
    %v154 = vadd.f32 %v152, %v153
    %v155 = vrot.slane %v154, 1
    %v156 = vadd.f32 %v154, %v155
    %v157 = vsel %vm138, %v129, 0.0
    %v158 = vsel %vm138, %v130, 0.0
    %v159 = vadd.f32 %v157, %v158
    %v160 = vrot.slane %v159, 4
    %v161 = vadd.f32 %v159, %v160
    %v162 = vrot.slane %v161, 2
    %v163 = vadd.f32 %v161, %v162
    %v164 = vrot.slane %v163, 1
    %v165 = vadd.f32 %v163, %v164
    %v166 = vsel %vm138, %v131, 0.0
    %v167 = vsel %vm138, %v132, 0.0
    %v168 = vadd.f32 %v166, %v167
    %v169 = vrot.slane %v168, 4
    %v170 = vadd.f32 %v168, %v169
    %v171 = vrot.slane %v170, 2
    %v172 = vadd.f32 %v170, %v171
    %v173 = vrot.slane %v172, 1
    %v174 = vadd.f32 %v172, %v173
    %v176 = vrot.slane %v137, 1
    %v177 = vrot.slane %v137, 2
    %v178 = vrot.slane %v137, 3
    %v183 = vrcp.pop %v137
    %v184 = vmul.f32 %v137, %v183
    %v185 = vsub.f32 1.0, %v184
    %v186 = vmul.f32 %v183, %v185
    %v187 = vadd.f32 %v183, %v186
    %vm188 = vweird.f32 %v137
    %vm189 = vweird.f32 %v183
    %vm190 = vmor %vm188, %vm189
    %v191 = vsel %vm190, %v183, %v187
    %v192 = vand.u32 2147483647, %v137
    %vm193 = vcmp.eq.f32.partialorder %v192, 8.507059e+37
    %v194 = vand.u32 %v137, 2147483648
    %v195 = vor.u32 1.1754944e-38, %v194
    %v196 = vsel %vm193, %v195, %v191
    %v197 = vmul.f32 %v147, %v196
    %v198 = vrcp.pop %v176
    %v199 = vmul.f32 %v176, %v198
    %v200 = vsub.f32 1.0, %v199
    %v201 = vmul.f32 %v198, %v200
    %v202 = vadd.f32 %v198, %v201
    %vm203 = vweird.f32 %v176
    %vm204 = vweird.f32 %v198
    %vm205 = vmor %vm203, %vm204
    %v206 = vsel %vm205, %v198, %v202
    %v207 = vand.u32 2147483647, %v176
    %vm208 = vcmp.eq.f32.partialorder %v207, 8.507059e+37
    %v209 = vand.u32 %v176, 2147483648
    %v210 = vor.u32 1.1754944e-38, %v209
    %v211 = vsel %vm208, %v210, %v206
    %v212 = vmul.f32 %v156, %v211
    %v213 = vrcp.pop %v177
    %v214 = vmul.f32 %v177, %v213
    %v215 = vsub.f32 1.0, %v214
    %v216 = vmul.f32 %v213, %v215
    %v217 = vadd.f32 %v213, %v216
    %vm218 = vweird.f32 %v177
    %vm219 = vweird.f32 %v213
    %vm220 = vmor %vm218, %vm219
    %v221 = vsel %vm220, %v213, %v217
    %v222 = vand.u32 2147483647, %v177
    %vm223 = vcmp.eq.f32.partialorder %v222, 8.507059e+37
    %v224 = vand.u32 %v177, 2147483648
    %v225 = vor.u32 1.1754944e-38, %v224
    %v226 = vsel %vm223, %v225, %v221
    %v227 = vmul.f32 %v165, %v226
    %v228 = vrcp.pop %v178
    %v229 = vmul.f32 %v178, %v228
    %v230 = vsub.f32 1.0, %v229
    %v231 = vmul.f32 %v228, %v230
    %v232 = vadd.f32 %v228, %v231
    %vm233 = vweird.f32 %v178
    %vm234 = vweird.f32 %v228
    %vm235 = vmor %vm233, %vm234
    %v236 = vsel %vm235, %v228, %v232
    %v237 = vand.u32 2147483647, %v178
    %vm238 = vcmp.eq.f32.partialorder %v237, 8.507059e+37
    %v239 = vand.u32 %v178, 2147483648
    %v240 = vor.u32 1.1754944e-38, %v239
    %v241 = vsel %vm238, %v240, %v236
    %v242 = vmul.f32 %v174, %v241
    %v243 = vtanh.pop %v197
    %v244 = vtanh.pop %v212
    %v245 = vtanh.pop %v227
    %v246 = vtanh.pop %v242
    %v247 = vpack.c.bf16 %v243, %v243
    %v248 = vpack.c.bf16 %v244, %v244
    %v249 = vpack.c.bf16 %v245, %v245
    %v250 = vpack.c.bf16 %v246, %v246
    %v251 = vld [vmem:[#allocation7] sm:$0xf]
    %v252 = vld [vmem:[#allocation7 + $0x4] sm:$0xf]
    %v253 = vld [vmem:[#allocation7 + $0x8] sm:$0xf]
    %v254 = vld [vmem:[#allocation7 + $0xc] sm:$0xf]
    %v255 = vld [vmem:[#allocation7 + $0x10] sm:$0xf]
    %v256 = vld [vmem:[#allocation7 + $0x14] sm:$0xf]
    %v257 = vld [vmem:[#allocation7 + $0x18] sm:$0xf]
    %v258 = vld [vmem:[#allocation7 + $0x1c] sm:$0xf]
    %v259 = vld [vmem:[%s3] sm:$0x1]
    %v261 = vperm.slane %v259, 0
    %v267 = vunpack.c.l.b16 %v247
    %v268 = vunpack.c.l.b16 %v248
    %v269 = vunpack.c.l.b16 %v249
    %v270 = vunpack.c.l.b16 %v250
    %v271 = vrot.slane %v268, 7
    %vm272 = vcmask 1041409
    %v273 = vsel %vm272, %v271, %v267
    %v274 = vrot.slane %v269, 6
    %vm275 = vcmask 1042434
    %v276 = vsel %vm275, %v274, %v273
    %v277 = vrot.slane %v270, 5
    %vm278 = vcmask 1043459
    %v279 = vsel %vm278, %v277, %v276
    %v280 = vpack.c.b16 %v279, %v279
    %v289 = vunpack.c.l.b16 %v251
    %v290 = vunpack.c.l.b16 %v252
    %v291 = vunpack.c.l.b16 %v253
    %v292 = vunpack.c.l.b16 %v254
    %v293 = vunpack.c.l.b16 %v255
    %v294 = vunpack.c.l.b16 %v256
    %v295 = vunpack.c.l.b16 %v257
    %v296 = vunpack.c.l.b16 %v258
    %v297 = vpack.c.b16 %v290, %v289
    %v298 = vpack.c.b16 %v292, %v291
    %v299 = vpack.c.b16 %v294, %v293
    %v300 = vpack.c.b16 %v296, %v295
    %v306 = vsel %vm138, %v280, 0
    %308 = vmatpush.bf16.msra.mxu0 0
    %309 = vmatpush.bf16.msra.mxu0 0
    %310 = vmatpush.bf16.msra.mxu0 0
    %311 = vmatpush.bf16.msra.mxu0 0
    %312 = vmatpush.bf16.msra.mxu0 %v300
    %313 = vmatpush.bf16.msra.mxu0 %v299
    %314 = vmatpush.bf16.msra.mxu0 %v298
    %315 = vmatpush.bf16.msra.mxu0 %v297
    %316 = vmatmul.bf16.gmra.mxu0 %v306
    %v317 = vpop.f32.mrf.mxu0
    %v318 = vadd.f32 %v261, %v317
    %v319 = vpop.f32.mrf.mxu0
    %320 = vdwg.mxu0
    %321 = vst [vmem:[#allocation8] sm:$0xf] %v318
    // Predicated region
    $region30: #{tpu_custom_call.1} parent=1 // pred_check
      _
    $region31: #{tpu_custom_call.1} parent=1 // pred_check_branch
      %323 = sbr.rel (0) target = $region33
    $region32: #{tpu_custom_call.1} parent=1 // pred_region
      %325 = vsyncadd [#allocation4], 0
      %s327 = sshll.u32 [#allocation8], 4
      %s328 = int_to_ptr.vmem [resolvable:$true] %s327
      %s329 = sshll.u32 %s4, 4
      %s330 = int_to_ptr.hbm [resolvable:$true] %s329
      %332 = dma.vmem_to_hbm [thread:$0]  %s328, 64, %s330, [#allocation4]
    $region33: #{tpu_custom_call.1} parent=1 // pred_fallthru
      _
    // Predicated region
    $region34: #{tpu_custom_call.1} parent=1 // pred_check
      _
    $region35: #{tpu_custom_call.1} parent=1 // pred_check_branch
      %334 = sbr.rel (0) target = $region37
    $region36: #{tpu_custom_call.1} parent=1 // pred_region
      %336 = dma.done [#allocation4], 64
    $region37: #{tpu_custom_call.1} parent=1 // pred_fallthru
      _
    %337 = vsyncpa [#allocation3], 1
    %338 = vsyncpa [#allocation6], 1
    %339 = vsyncpa [#allocation4], 1

</llo_original>
